<compile_context>
chip_gen: v7x
topology: tpu7x:2x2x1
jax: 0.10.0
libtpu: 0.0.40
codegen_flags: <defaults>
</compile_context>

<pallas_src>
import functools
import math

import jax
import jax.numpy as jnp
from jax.experimental import pallas as pl
from jax.experimental.pallas import tpu as pltpu


def _round_up(x, m):
    return ((x + m - 1) // m) * m


def _vmem_capacity_bytes():
    try:
        return int(pltpu.get_tpu_info().vmem_capacity_bytes)
    except Exception:
        # Conservative fallback: v7x has 64 MiB per TensorCore (v5e/v6e have 128 MiB,
        # so 64 MiB is safe everywhere).
        return 64 * 1024 * 1024


def _pick_tile_rows(rows, features, itemsize, capacity, two_tc):
    """Largest row tile whose double-buffered x/out tiles PLUS the f32 in-kernel
    temporaries fit a conservative ~40% VMEM budget. On 2-TC chips (v7x) keep
    >=4 grid steps when possible so both TensorCores get >=2 steps each; on
    single-TC v5e/v6e the grid is a serial loop, so keep the largest tile."""
    budget = int(capacity * 0.40)
    # (x + out) double-buffered in the input dtype + ~2 f32 intermediates per row.
    bytes_per_row = 2 * 2 * features * itemsize + 2 * features * 4
    tile = budget // max(bytes_per_row, 1)
    tile = max(16, (tile // 16) * 16)      # multiple of 16: aligned for f32 and bf16
    if two_tc:
        while tile > 16 and pl.cdiv(rows, tile) < 4:
            tile = max(16, ((tile // 2) // 16) * 16)
    tile = min(tile, _round_up(rows, 16))  # don't over-tile tiny inputs
    return max(tile, 8)


def _layernorm_kernel(x_ref, a_ref, b_ref, o_ref, *, eps, features,
                      low_precision_affine):
    x = x_ref[...].astype(jnp.float32)                 # (tile_rows, features)
    n = jnp.float32(features)

    # Two-pass mean/variance: stable (no E[x^2]-E[x]^2 cancellation) and free of
    # extra HBM traffic since the tile is already resident in VMEM.
    mean = jnp.sum(x, axis=-1, keepdims=True) * (1.0 / n)
    diff = x - mean
    # PyTorch x.std(-1) is UNBIASED (divisor N-1); eps is added to std, not var.
    # features == 1 yields NaN, matching torch.std's behavior.
    var = jnp.sum(diff * diff, axis=-1, keepdims=True) * (1.0 / (n - 1.0))
    std = jnp.sqrt(var)

    # Column-wise reciprocal on the (tile_rows, 1) column instead of a full-tile
    # divide (frees VALU slots); exact form to preserve precision.
    inv = pl.reciprocal(std + eps, approx=False)       # (tile_rows, 1)

    xn = diff * inv                                    # f32 normalized tile
    if low_precision_affine:
        # bf16 inputs (v6e/v7x have bf16 VALU): do the gamma/beta affine in bf16,
        # halving VALU cost of the widest ops and keeping the kernel HBM-bound.
        xn = xn.astype(o_ref.dtype)
        a = a_ref[...].astype(o_ref.dtype)
        b = b_ref[...].astype(o_ref.dtype)
        o_ref[...] = xn * a + b
    else:
        a = a_ref[...].astype(jnp.float32)             # (1, features)
        b = b_ref[...].astype(jnp.float32)             # (1, features)
        o_ref[...] = (xn * a + b).astype(o_ref.dtype)


def layernorm(x, a_2, b_2, eps=1e-6, tile_rows=None):
    """LayerNorm over the last axis of x, matching the PyTorch module."""
    orig_shape = x.shape
    features = int(orig_shape[-1])
    rows = int(math.prod(orig_shape[:-1])) if len(orig_shape) > 1 else 1

    itemsize = jnp.dtype(x.dtype).itemsize
    capacity = _vmem_capacity_bytes()
    two_tc = capacity <= (64 << 20)        # v7x proxy: 64 MiB VMEM per TensorCore
    if tile_rows is None:
        tile_rows = _pick_tile_rows(rows, features, itemsize, capacity, two_tc)

    x2d = x.reshape(rows, features)
    a2d = a_2.reshape(1, features)
    b2d = b_2.reshape(1, features)

    grid = (pl.cdiv(rows, tile_rows),)     # partial last block handled by Pallas

    # Scoped-VMEM budget: double-buffered x/out tiles + f32 intermediates
    # + scale/bias + slack; capped at 0.8x capacity (headroom for Mosaic scratch).
    block_bytes = tile_rows * features * itemsize
    f32_bytes = tile_rows * features * 4
    vmem_limit = 4 * block_bytes + 2 * f32_bytes + 8 * features * 4 + (4 << 20)
    vmem_limit = int(min(max(vmem_limit, 16 << 20), int(capacity * 0.8)))

    low_precision_affine = jnp.dtype(x.dtype) == jnp.bfloat16

    kernel = functools.partial(
        _layernorm_kernel, eps=eps, features=features,
        low_precision_affine=low_precision_affine)

    cost = pl.CostEstimate(
        flops=int(9 * rows * features),
        transcendentals=int(2 * rows),
        bytes_accessed=int(2 * rows * features * itemsize + 2 * features * itemsize),
    )

    out2d = pl.pallas_call(
        kernel,
        out_shape=jax.ShapeDtypeStruct((rows, features), x.dtype),
        grid_spec=pltpu.PrefetchScalarGridSpec(
            num_scalar_prefetch=0,
            grid=grid,
            in_specs=[
                pl.BlockSpec((tile_rows, features), lambda i: (i, 0)),
                pl.BlockSpec((1, features), lambda i: (0, 0)),
                pl.BlockSpec((1, features), lambda i: (0, 0)),
            ],
            out_specs=pl.BlockSpec((tile_rows, features), lambda i: (i, 0)),
        ),
        compiler_params=pltpu.CompilerParams(
            dimension_semantics=("parallel",),
            vmem_limit_bytes=vmem_limit,
        ),
        cost_estimate=cost,
    )(x2d, a2d, b2d)

    return out2d.reshape(orig_shape)


def _reference(x, a_2, b_2, eps):
    features = x.shape[-1]
    mean = jnp.mean(x, axis=-1, keepdims=True)
    std = jnp.sqrt(jnp.sum((x - mean) ** 2, axis=-1, keepdims=True) / (features - 1))
    return a_2 * (x - mean) / (std + eps) + b_2


if __name__ == "__main__":
    key = jax.random.PRNGKey(0)
    batch, seq, hidden = 2, 8, 32
    eps = 1e-6

    x = jax.random.normal(key, (batch, seq, hidden), dtype=jnp.float32)
    # Deterministic parameter init, exactly as the module's __init__:
    a_2 = jnp.ones((hidden,), dtype=jnp.float32)
    b_2 = jnp.zeros((hidden,), dtype=jnp.float32)

    out = layernorm(x, a_2, b_2, eps=eps)
    out = jax.block_until_ready(out)
    ref = _reference(x, a_2, b_2, eps)
    assert jnp.allclose(out, ref, atol=1e-4, rtol=1e-4), "mismatch vs reference"

    # Also exercise the partial-last-block path (rows not divisible by tile_rows).
    x3 = jax.random.normal(jax.random.PRNGKey(1), (3, 8, hidden), dtype=jnp.float32)
    out3 = jax.block_until_ready(layernorm(x3, a_2, b_2, eps=eps, tile_rows=16))
    ref3 = _reference(x3, a_2, b_2, eps)
    assert jnp.allclose(out3, ref3, atol=1e-4, rtol=1e-4), "partial-block mismatch"

    print("KERNEL_OK")
</pallas_src>

<mosaic_0001>
module attributes {stable_mosaic.version = 11 : i64} {
  func.func @_layernorm_kernel(%arg0: i32, %arg1: memref<16x32xf32, #tpu.memory_space<vmem>>, %arg2: memref<1x32xf32, #tpu.memory_space<vmem>>, %arg3: memref<1x32xf32, #tpu.memory_space<vmem>>, %arg4: memref<16x32xf32, #tpu.memory_space<vmem>>) attributes {dimension_semantics = [#tpu.dimension_semantics<parallel>], iteration_bounds = array<i64: 1>, scalar_prefetch = 0 : i64, scratch_operands = 0 : i64, tpu.core_type = #tpu.core_type<tc>, window_params = [{transform_indices = @transform_0, window_bounds = array<i64: 16, 32>}, {pipeline_mode = #tpu.pipeline_mode<synchronous>, transform_indices = @transform_1, window_bounds = array<i64: 1, 32>}, {pipeline_mode = #tpu.pipeline_mode<synchronous>, transform_indices = @transform_2, window_bounds = array<i64: 1, 32>}, {transform_indices = @transform_3, window_bounds = array<i64: 16, 32>}]} {
    %c0 = arith.constant 0 : index
    %c0_0 = arith.constant 0 : index
    %0 = vector.load %arg1[%c0, %c0_0] : memref<16x32xf32, #tpu.memory_space<vmem>>, vector<16x32xf32>
    %cst = arith.constant dense<0.000000e+00> : vector<16xf32>
    %1 = vector.multi_reduction <add>, %0, %cst [1] : vector<16x32xf32> to vector<16xf32>
    %2 = vector.shape_cast %1 : vector<16xf32> to vector<16x1xf32>
    %cst_1 = arith.constant 1.000000e+00 : f32
    %cst_2 = arith.constant 3.200000e+01 : f32
    %3 = arith.divf %cst_1, %cst_2 : f32
    %4 = vector.broadcast %3 : f32 to vector<16x1xf32>
    %5 = arith.mulf %2, %4 : vector<16x1xf32>
    %6 = vector.broadcast %5 : vector<16x1xf32> to vector<16x32xf32>
    %7 = arith.subf %0, %6 : vector<16x32xf32>
    %8 = arith.mulf %7, %7 : vector<16x32xf32>
    %cst_3 = arith.constant dense<0.000000e+00> : vector<16xf32>
    %9 = vector.multi_reduction <add>, %8, %cst_3 [1] : vector<16x32xf32> to vector<16xf32>
    %10 = vector.shape_cast %9 : vector<16xf32> to vector<16x1xf32>
    %cst_4 = arith.constant 3.200000e+01 : f32
    %cst_5 = arith.constant 1.000000e+00 : f32
    %11 = arith.subf %cst_4, %cst_5 : f32
    %cst_6 = arith.constant 1.000000e+00 : f32
    %12 = arith.divf %cst_6, %11 : f32
    %13 = vector.broadcast %12 : f32 to vector<16x1xf32>
    %14 = arith.mulf %10, %13 : vector<16x1xf32>
    %15 = math.sqrt %14 : vector<16x1xf32>
    %cst_7 = arith.constant 9.99999997E-7 : f32
    %16 = vector.broadcast %cst_7 : f32 to vector<16x1xf32>
    %17 = arith.addf %15, %16 : vector<16x1xf32>
    %18 = tpu.reciprocal %17 : vector<16x1xf32> -> vector<16x1xf32>
    %19 = vector.broadcast %18 : vector<16x1xf32> to vector<16x32xf32>
    %20 = arith.mulf %7, %19 : vector<16x32xf32>
    %c0_8 = arith.constant 0 : index
    %c0_9 = arith.constant 0 : index
    %21 = vector.load %arg2[%c0_8, %c0_9] : memref<1x32xf32, #tpu.memory_space<vmem>>, vector<1x32xf32>
    %c0_10 = arith.constant 0 : index
    %c0_11 = arith.constant 0 : index
    %22 = vector.load %arg3[%c0_10, %c0_11] : memref<1x32xf32, #tpu.memory_space<vmem>>, vector<1x32xf32>
    %23 = vector.broadcast %21 : vector<1x32xf32> to vector<16x32xf32>
    %24 = arith.mulf %20, %23 : vector<16x32xf32>
    %25 = vector.broadcast %22 : vector<1x32xf32> to vector<16x32xf32>
    %26 = arith.addf %24, %25 : vector<16x32xf32>
    %c0_12 = arith.constant 0 : index
    %c0_13 = arith.constant 0 : index
    %27 = vector.load %arg4[%c0_12, %c0_13] : memref<16x32xf32, #tpu.memory_space<vmem>>, vector<16x32xf32>
    tpu.vector_store %arg4[%c0_12, %c0_13], %26 {strides = array<i32>} : memref<16x32xf32, #tpu.memory_space<vmem>>, vector<16x32xf32>,
    return
  }
  func.func @transform_0(%arg0: i32) -> (i32, i32) {
    %c0_i32 = arith.constant 0 : i32
    %c0_i32_0 = arith.constant 0 : i32
    return %arg0, %c0_i32 : i32, i32
  }
  func.func @transform_1(%arg0: i32) -> (i32, i32) {
    %c0_i32 = arith.constant 0 : i32
    %c0_i32_0 = arith.constant 0 : i32
    %c0_i32_1 = arith.constant 0 : i32
    return %c0_i32, %c0_i32_0 : i32, i32
  }
  func.func @transform_2(%arg0: i32) -> (i32, i32) {
    %c0_i32 = arith.constant 0 : i32
    %c0_i32_0 = arith.constant 0 : i32
    %c0_i32_1 = arith.constant 0 : i32
    return %c0_i32, %c0_i32_0 : i32, i32
  }
  func.func @transform_3(%arg0: i32) -> (i32, i32) {
    %c0_i32 = arith.constant 0 : i32
    %c0_i32_0 = arith.constant 0 : i32
    return %arg0, %c0_i32 : i32, i32
  }
}

</mosaic_0001>

<llo_original>
// kernel: tpu_custom_call.1
$region0: #{tpu_custom_call.1}
  #allocation0 [shape = 'u32[]', space=smem, size = 0x4, offset = 0x4, fixed_abs, tag = 'smem constant byte address 0x4 - core index']
  #allocation1 [shape = 'u32[144,128]{1,0:T(1,128)}', space=vmem, size = 0x12000, scoped, tag = 'internal scratch']
  %s0 = inlined_call_operand.hbm [shape: f32[16,32], index: 0, kind: input, shape index: {}]
  %s1 = inlined_call_operand.vmem [shape: f32[1,32], index: 1, kind: input, shape index: {}]
  %s2 = inlined_call_operand.vmem [shape: f32[1,32], index: 2, kind: input, shape index: {}]
  %s3 = inlined_call_operand.hbm [shape: f32[16,32], index: 3, kind: output, shape index: {}]
  %s4 = sld [smem:[#allocation0]]
  $region26: #{tpu_custom_call.1} parent=0
    _
  %s6 = ssub.s32 1, %s4
  %s7 = scalar_select 0, %s6, %s4
  $region1: #{tpu_custom_call.1} parent=0
    #allocation2 [shape = 'u8[8192]{0}', space=vmem, size = 0x2000, scoped, tag = 'input window, operand 0, single buffered']
    #allocation3 [shape = 's32[1]{0}', space=sflag, size = 0x4, scoped, tag = 'scoped memory for tpu_custom_call.1']
    #allocation4 [shape = 's32[1]{0}', space=sflag, size = 0x4, scoped, tag = 'scoped memory for tpu_custom_call.1']
    #allocation5 [shape = 'u8[8192]{0}', space=vmem, size = 0x2000, scoped, tag = 'output window, operand 0, single buffered']
    %8 = vsyncpa [#allocation3], 0
    %9 = vsyncpa [#allocation4], 0
    // Predicated region
    $region2: #{tpu_custom_call.1} parent=1 // pred_check
      _
    $region3: #{tpu_custom_call.1} parent=1 // pred_check_branch
      %11 = sbr.rel (0) target = $region5
    $region4: #{tpu_custom_call.1} parent=1 // pred_region
      %s13 = ssub.s32 256, 256
      %14 = vsyncadd [#allocation3], %s13
      %s15 = sshll.u32 [#allocation2], 4
      %s16 = int_to_ptr.vmem [resolvable:$true] %s15
      %21 = dma.hbm_to_vmem [thread:$0]  %s0, 256, %s16, [#allocation3], 128, 128, 8
    $region5: #{tpu_custom_call.1} parent=1 // pred_fallthru
      _
    // Predicated region
    $region6: #{tpu_custom_call.1} parent=1 // pred_check
      _
    $region7: #{tpu_custom_call.1} parent=1 // pred_check_branch
      %23 = sbr.rel (0) target = $region9
    $region8: #{tpu_custom_call.1} parent=1 // pred_region
      _
    $region9: #{tpu_custom_call.1} parent=1 // pred_fallthru
      _
    // Predicated region
    $region10: #{tpu_custom_call.1} parent=1 // pred_check
      _
    $region11: #{tpu_custom_call.1} parent=1 // pred_check_branch
      %25 = sbr.rel (0) target = $region13
    $region12: #{tpu_custom_call.1} parent=1 // pred_region
      _
    $region13: #{tpu_custom_call.1} parent=1 // pred_fallthru
      _
    // Predicated region
    $region14: #{tpu_custom_call.1} parent=1 // pred_check
      _
    $region15: #{tpu_custom_call.1} parent=1 // pred_check_branch
      %27 = sbr.rel (0) target = $region17
    $region16: #{tpu_custom_call.1} parent=1 // pred_region
      %28 = dma.done [#allocation3], 256
    $region17: #{tpu_custom_call.1} parent=1 // pred_fallthru
      _
    %v29 = vld [vmem:[#allocation2] sm:$0xff]
    %v30 = vld [vmem:[#allocation2 + $0x8] sm:$0xff]
    %vm31 = vcmask 261120
    %v32 = vsel %vm31, %v29, 0.0
    %33 = vadd.xlane.f32.xlu0 %v32
    %v34 = vpop.xlane.xlu0 %33
    %v35 = vsel %vm31, %v30, 0.0
    %36 = vadd.xlane.f32.xlu0 %v35
    %v37 = vpop.xlane.xlu0 %36
    %v38 = vmul.f32 %v34, 0.03125
    %v39 = vmul.f32 %v37, 0.03125
    %v40 = vsub.f32 %v29, %v38
    %v41 = vsub.f32 %v30, %v39
    %v42 = vmul.f32 %v40, %v40
    %v43 = vmul.f32 %v41, %v41
    %v44 = vsel %vm31, %v42, 0.0
    %45 = vadd.xlane.f32.xlu0 %v44
    %v46 = vpop.xlane.xlu0 %45
    %v47 = vsel %vm31, %v43, 0.0
    %48 = vadd.xlane.f32.xlu0 %v47
    %v49 = vpop.xlane.xlu0 %48
    %v50 = vmul.f32 %v46, 0.032258064
    %v51 = vmul.f32 %v49, 0.032258064
    %v52 = vrsqrt.pop %v50
    %v53 = vmul.f32 %v50, %v52
    %vm54 = vcmp.eq.f32.partialorder %v50, inf
    %v55 = vsel %vm54, %v50, %v53
    %vm56 = vcmp.eq.f32.partialorder %v50, 0.0
    %v57 = vand.u32 %v50, 2147483648
    %v58 = vsel %vm56, %v57, %v55
    %v59 = vrsqrt.pop %v51
    %v60 = vmul.f32 %v51, %v59
    %vm61 = vcmp.eq.f32.partialorder %v51, inf
    %v62 = vsel %vm61, %v51, %v60
    %vm63 = vcmp.eq.f32.partialorder %v51, 0.0
    %v64 = vand.u32 %v51, 2147483648
    %v65 = vsel %vm63, %v64, %v62
    %v66 = vadd.f32 %v58, 1e-06
    %v67 = vadd.f32 %v65, 1e-06
    %v68 = vrcp.pop %v66
    %v69 = vrcp.pop %v67
    %v70 = vmul.f32 %v40, %v68
    %v71 = vmul.f32 %v41, %v69
    %v72 = vld [vmem:[%s1] sm:$0x1]
    %v73 = vld [vmem:[%s2] sm:$0x1]
    %v75 = vlaneseq
    %v76 = vshrl.u32 %v75, 7
    %v77 = vsub.s32 0, %v76
    %v78 = vrot.slane %v72, %v77
    %v80 = vmul.f32 %v70, %v78
    %v81 = vmul.f32 %v71, %v78
    %v83 = vlaneseq
    %v84 = vshrl.u32 %v83, 7
    %v85 = vsub.s32 0, %v84
    %v86 = vrot.slane %v73, %v85
    %v88 = vadd.f32 %v80, %v86
    %v89 = vadd.f32 %v81, %v86
    %90 = vst.msk [vmem:[#allocation5] sm:$0xff] %vm31, %v88
    %91 = vst.msk [vmem:[#allocation5 + $0x8] sm:$0xff] %vm31, %v89
    // Predicated region
    $region18: #{tpu_custom_call.1} parent=1 // pred_check
      _
    $region19: #{tpu_custom_call.1} parent=1 // pred_check_branch
      %93 = sbr.rel (0) target = $region21
    $region20: #{tpu_custom_call.1} parent=1 // pred_region
      %s95 = ssub.s32 256, 256
      %96 = vsyncadd [#allocation4], %s95
      %s97 = sshll.u32 [#allocation5], 4
      %s98 = int_to_ptr.vmem [resolvable:$true] %s97
      %103 = dma.vmem_to_hbm [thread:$0]  %s98, 256, %s3, [#allocation4], 128, 128, 8
    $region21: #{tpu_custom_call.1} parent=1 // pred_fallthru
      _
    // Predicated region
    $region22: #{tpu_custom_call.1} parent=1 // pred_check
      _
    $region23: #{tpu_custom_call.1} parent=1 // pred_check_branch
      %105 = sbr.rel (0) target = $region25
    $region24: #{tpu_custom_call.1} parent=1 // pred_region
      %106 = dma.done [#allocation4], 256
    $region25: #{tpu_custom_call.1} parent=1 // pred_fallthru
      _
    %107 = vsyncpa [#allocation3], 1
    %108 = vsyncpa [#allocation4], 1

</llo_original>
